<compile_context>
chip_gen: v6e
topology: v6e:2x2x1
jax: 0.10.0
libtpu: 0.0.40
codegen_flags: <defaults>
</compile_context>

<pallas_src>
import functools

import jax
import jax.numpy as jnp
from jax.experimental import pallas as pl
from jax.experimental.pallas import tpu as pltpu


def _pool_sum_kernel(*refs, height: int):
    """Accumulate sum over (height, HW tiles) into a resident (R, 1) block."""
    x_refs = refs[:height]
    o_ref = refs[height]

    @pl.when(pl.program_id(0) == 0)
    def _init():
        o_ref[...] = jnp.zeros_like(o_ref)

    # No feats_sum temporary: reduce each height slab over lanes, then add the
    # tiny (R, 1) partials.
    partial = jnp.sum(x_refs[0][...].astype(jnp.float32), axis=-1, keepdims=True)
    for h in range(1, height):
        partial = partial + jnp.sum(
            x_refs[h][...].astype(jnp.float32), axis=-1, keepdims=True
        )
    o_ref[...] += partial


def _apply_attn_kernel(*refs, height: int):
    """out_tile = sum_h attn_h (R,1) * x_h (R,T) — per-row lane-broadcast."""
    attn_refs = refs[:height]
    x_refs = refs[height:2 * height]
    o_ref = refs[2 * height]

    acc = attn_refs[0][...] * x_refs[0][...].astype(jnp.float32)
    for h in range(1, height):
        acc = acc + attn_refs[h][...] * x_refs[h][...].astype(jnp.float32)
    o_ref[...] = acc.astype(o_ref.dtype)


def _pick_tile_lanes(rows, hw128, itemsize, height):
    """Choose an HW tile (multiple of 128) targeting ~2 MiB per input tile."""
    target = (2 * 1024 * 1024) // max(1, rows * itemsize)
    tile = max(128, min(hw128, (target // 128) * 128))
    # Double-buffered (height inputs + 1 output) must stay well under VMEM.
    while tile > 128 and 2 * (height + 1) * rows * tile * itemsize > 16 * 1024 * 1024:
        tile = max(128, (tile // 2 // 128) * 128)
    return tile


def sk_fusion(in_feats, w1, w2):
    """in_feats: list of `height` arrays, each (B, C, H, W) NCHW."""
    height = len(in_feats)
    B, C, H, W = in_feats[0].shape
    HW = H * W
    R = B * C
    dtype = in_feats[0].dtype
    itemsize = jnp.dtype(dtype).itemsize

    # Lane-dense layout: pad HW up to a multiple of 128 / of the tile.
    hw128 = ((HW + 127) // 128) * 128
    tile_lanes = _pick_tile_lanes(R, hw128, itemsize, height)
    hw_pad = ((hw128 + tile_lanes - 1) // tile_lanes) * tile_lanes
    n_tiles = hw_pad // tile_lanes

    # Sublane-dense (B*C, HW) views; reshape of contiguous NCHW is copy-free.
    feats = []
    for f in in_feats:
        f2 = f.reshape(R, HW)
        if hw_pad != HW:
            # Zero padding: does not perturb the pooled sum; padded output
            # lanes are sliced off below.
            f2 = jnp.pad(f2, ((0, 0), (0, hw_pad - HW)))
        feats.append(f2)

    vmem_limit = 32 * 1024 * 1024  # safe on v5e/v6e (128 MiB) and v7x (64 MiB)

    # ---- kernel 1: pooled sum over (height, HW), tiled over HW -------------
    pool_sum = pl.pallas_call(
        functools.partial(_pool_sum_kernel, height=height),
        out_shape=jax.ShapeDtypeStruct((R, 1), jnp.float32),
        grid=(n_tiles,),
        in_specs=[pl.BlockSpec((R, tile_lanes), lambda i: (0, i))] * height,
        out_specs=pl.BlockSpec((R, 1), lambda i: (0, 0)),
        compiler_params=pltpu.CompilerParams(
            dimension_semantics=("arbitrary",),
            vmem_limit_bytes=vmem_limit,
        ),
    )(*feats)  # (R, 1) float32

    # ---- tiny MLP + softmax on (B, C): plain JAX between the two kernels ----
    # (review: these matmuls pad to full MXU tiles inside a kernel; keeping
    #  them in XLA keeps the kernels pure VPU/DMA)
    pooled = pool_sum.reshape(B, C) * (1.0 / float(HW))            # (B, C) f32
    hid = jnp.maximum(pooled @ w1.astype(jnp.float32).T, 0.0)      # (B, d)
    logits = hid @ w2.astype(jnp.float32).T                        # (B, height*C)
    attn = jax.nn.softmax(logits.reshape(B, height, C), axis=1)    # (B, height, C)
    attn_cols = [attn[:, h, :].reshape(R, 1).astype(jnp.float32) for h in range(height)]

    # ---- kernel 2: attention-weighted sum over height, tiled over HW --------
    out_flat = pl.pallas_call(
        functools.partial(_apply_attn_kernel, height=height),
        out_shape=jax.ShapeDtypeStruct((R, hw_pad), dtype),
        grid=(n_tiles,),
        in_specs=(
            [pl.BlockSpec((R, 1), lambda i: (0, 0))] * height            # attn columns
            + [pl.BlockSpec((R, tile_lanes), lambda i: (0, i))] * height  # feature slabs
        ),
        out_specs=pl.BlockSpec((R, tile_lanes), lambda i: (0, i)),
        compiler_params=pltpu.CompilerParams(
            dimension_semantics=("parallel",),   # 2-TC sharding on v7x
            vmem_limit_bytes=vmem_limit,
        ),
    )(*attn_cols, *feats)  # (R, hw_pad)

    out = out_flat[:, :HW].reshape(B, C, H, W)
    return out


def sk_fusion_reference(in_feats, w1, w2):
    """Pure-JAX reference reproducing the PyTorch forward."""
    height = len(in_feats)
    B, C, H, W = in_feats[0].shape
    x = jnp.stack(in_feats, axis=1)                    # (B, height, C, H, W)
    feats_sum = jnp.sum(x, axis=1)                     # (B, C, H, W)
    pooled = jnp.mean(feats_sum, axis=(2, 3))          # (B, C)
    hid = jnp.maximum(pooled @ w1.T, 0.0)              # (B, d)
    logits = hid @ w2.T                                # (B, height*C)
    attn = jax.nn.softmax(logits.reshape(B, height, C), axis=1)
    out = jnp.sum(x * attn[:, :, :, None, None], axis=1)
    return out


if __name__ == "__main__":
    # SKFusion(dim=4, height=2, reduction=8) -> d = max(4 // 8, 4) = 4
    B, C, H, W = 2, 4, 16, 16
    height = 2
    d = max(C // 8, 4)

    key = jax.random.PRNGKey(0)
    k1, k2, k3, k4 = jax.random.split(key, 4)
    feat0 = jax.random.normal(k1, (B, C, H, W), dtype=jnp.float32)
    feat1 = jax.random.normal(k2, (B, C, H, W), dtype=jnp.float32)
    # Conv2d(dim, d, 1, bias=False) weight (d, C, 1, 1) -> (d, C)
    w1 = jax.random.normal(k3, (d, C), dtype=jnp.float32) * 0.1
    # Conv2d(d, dim*height, 1, bias=False) weight (height*C, d, 1, 1) -> (height*C, d)
    w2 = jax.random.normal(k4, (height * C, d), dtype=jnp.float32) * 0.1

    out = sk_fusion([feat0, feat1], w1, w2)
    out = jax.block_until_ready(out)

    ref = sk_fusion_reference([feat0, feat1], w1, w2)
    assert out.shape == (B, C, H, W)
    assert jnp.allclose(out, ref, atol=1e-5, rtol=1e-5), "mismatch vs reference"

    print("KERNEL_OK")
</pallas_src>

<mosaic_0001>
module attributes {stable_mosaic.version = 11 : i64} {
  func.func @_pool_sum_kernel(%arg0: i32, %arg1: memref<8x256xf32, #tpu.memory_space<vmem>>, %arg2: memref<8x256xf32, #tpu.memory_space<vmem>>, %arg3: memref<8x1xf32, #tpu.memory_space<vmem>>) attributes {dimension_semantics = [#tpu.dimension_semantics<arbitrary>], iteration_bounds = array<i64: 1>, scalar_prefetch = 0 : i64, scratch_operands = 0 : i64, tpu.core_type = #tpu.core_type<tc>, window_params = [{transform_indices = @transform_0, window_bounds = array<i64: 8, 256>}, {transform_indices = @transform_1, window_bounds = array<i64: 8, 256>}, {pipeline_mode = #tpu.pipeline_mode<synchronous>, transform_indices = @transform_2, window_bounds = array<i64: 8, 1>}]} {
    %c0_i32 = arith.constant 0 : i32
    %0 = arith.cmpi eq, %arg0, %c0_i32 : i32
    %1 = arith.extui %0 : i1 to i32
    %c0_i32_0 = arith.constant 0 : i32
    %2 = arith.cmpi ne, %1, %c0_i32_0 : i32
    scf.if %2 {
      %cst_9 = arith.constant 0.000000e+00 : f32
      %13 = vector.broadcast %cst_9 : f32 to vector<8x1xf32>
      %c0_10 = arith.constant 0 : index
      %c0_11 = arith.constant 0 : index
      %14 = vector.load %arg3[%c0_10, %c0_11] : memref<8x1xf32, #tpu.memory_space<vmem>>, vector<8x1xf32>
      tpu.vector_store %arg3[%c0_10, %c0_11], %13 {strides = array<i32>} : memref<8x1xf32, #tpu.memory_space<vmem>>, vector<8x1xf32>,
    } else {
    }
    %c0 = arith.constant 0 : index
    %c0_1 = arith.constant 0 : index
    %3 = vector.load %arg1[%c0, %c0_1] : memref<8x256xf32, #tpu.memory_space<vmem>>, vector<8x256xf32>
    %cst = arith.constant dense<0.000000e+00> : vector<8xf32>
    %4 = vector.multi_reduction <add>, %3, %cst [1] : vector<8x256xf32> to vector<8xf32>
    %5 = vector.shape_cast %4 : vector<8xf32> to vector<8x1xf32>
    %c0_2 = arith.constant 0 : index
    %c0_3 = arith.constant 0 : index
    %6 = vector.load %arg2[%c0_2, %c0_3] : memref<8x256xf32, #tpu.memory_space<vmem>>, vector<8x256xf32>
    %cst_4 = arith.constant dense<0.000000e+00> : vector<8xf32>
    %7 = vector.multi_reduction <add>, %6, %cst_4 [1] : vector<8x256xf32> to vector<8xf32>
    %8 = vector.shape_cast %7 : vector<8xf32> to vector<8x1xf32>
    %9 = arith.addf %5, %8 : vector<8x1xf32>
    %c0_5 = arith.constant 0 : index
    %c0_6 = arith.constant 0 : index
    %10 = vector.load %arg3[%c0_5, %c0_6] : memref<8x1xf32, #tpu.memory_space<vmem>>, vector<8x1xf32>
    %11 = arith.addf %10, %9 : vector<8x1xf32>
    %c0_7 = arith.constant 0 : index
    %c0_8 = arith.constant 0 : index
    %12 = vector.load %arg3[%c0_7, %c0_8] : memref<8x1xf32, #tpu.memory_space<vmem>>, vector<8x1xf32>
    tpu.vector_store %arg3[%c0_7, %c0_8], %11 {strides = array<i32>} : memref<8x1xf32, #tpu.memory_space<vmem>>, vector<8x1xf32>,
    return
  }
  func.func @transform_0(%arg0: i32) -> (i32, i32) {
    %c0_i32 = arith.constant 0 : i32
    %c0_i32_0 = arith.constant 0 : i32
    return %c0_i32, %arg0 : i32, i32
  }
  func.func @transform_1(%arg0: i32) -> (i32, i32) {
    %c0_i32 = arith.constant 0 : i32
    %c0_i32_0 = arith.constant 0 : i32
    return %c0_i32, %arg0 : i32, i32
  }
  func.func @transform_2(%arg0: i32) -> (i32, i32) {
    %c0_i32 = arith.constant 0 : i32
    %c0_i32_0 = arith.constant 0 : i32
    %c0_i32_1 = arith.constant 0 : i32
    return %c0_i32, %c0_i32_0 : i32, i32
  }
}

</mosaic_0001>

<llo_original>
// kernel: tpu_custom_call.1
$region0: #{tpu_custom_call.1}
  #allocation0 [shape = 'u32[]', space=smem, size = 0x4, offset = 0x4, fixed_abs, tag = 'smem constant byte address 0x4 - core index']
  #allocation1 [shape = 'u32[144,128]{1,0:T(1,128)}', space=vmem, size = 0x12000, scoped, tag = 'internal scratch']
  %s0 = inlined_call_operand.hbm [shape: f32[8,256], index: 0, kind: input, shape index: {}]
  %s1 = inlined_call_operand.hbm [shape: f32[8,256], index: 1, kind: input, shape index: {}]
  %s2 = inlined_call_operand.vmem [shape: f32[8,1], index: 2, kind: output, shape index: {}]
  %s3 = sld [smem:[#allocation0]]
  $region30: #{tpu_custom_call.1} parent=0
    _
  %s5 = ssub.s32 1, %s3
  %s6 = scalar_select 0, %s5, %s3
  $region1: #{tpu_custom_call.1} parent=0
    #allocation2 [shape = 'u8[8192]{0}', space=vmem, size = 0x2000, scoped, tag = 'input window, operand 0, single buffered']
    #allocation3 [shape = 's32[1]{0}', space=sflag, size = 0x4, scoped, tag = 'scoped memory for tpu_custom_call.1']
    #allocation4 [shape = 'u8[8192]{0}', space=vmem, size = 0x2000, scoped, tag = 'input window, operand 1, single buffered']
    #allocation5 [shape = 's32[1]{0}', space=sflag, size = 0x4, scoped, tag = 'scoped memory for tpu_custom_call.1']
    %7 = vsyncpa [#allocation3], 0
    %8 = vsyncpa [#allocation5], 0
    // Predicated region
    $region2: #{tpu_custom_call.1} parent=1 // pred_check
      _
    $region3: #{tpu_custom_call.1} parent=1 // pred_check_branch
      %10 = sbr.rel (0) target = $region5
    $region4: #{tpu_custom_call.1} parent=1 // pred_region
      %s12 = ssub.s32 256, 256
      %13 = vsyncadd [#allocation3], %s12
      %s15 = sshll.u32 [#allocation2], 4
      %s16 = int_to_ptr.vmem [resolvable:$true] %s15
      %18 = dma.hbm_to_vmem [thread:$0]  %s0, 256, %s16, [#allocation3]
    $region5: #{tpu_custom_call.1} parent=1 // pred_fallthru
      _
    // Predicated region
    $region6: #{tpu_custom_call.1} parent=1 // pred_check
      _
    $region7: #{tpu_custom_call.1} parent=1 // pred_check_branch
      %20 = sbr.rel (0) target = $region9
    $region8: #{tpu_custom_call.1} parent=1 // pred_region
      %s22 = ssub.s32 256, 256
      %23 = vsyncadd [#allocation5], %s22
      %s25 = sshll.u32 [#allocation4], 4
      %s26 = int_to_ptr.vmem [resolvable:$true] %s25
      %28 = dma.hbm_to_vmem [thread:$0]  %s1, 256, %s26, [#allocation5]
    $region9: #{tpu_custom_call.1} parent=1 // pred_fallthru
      _
    // Predicated region
    $region10: #{tpu_custom_call.1} parent=1 // pred_check
      _
    $region11: #{tpu_custom_call.1} parent=1 // pred_check_branch
      %30 = sbr.rel (0) target = $region13
    $region12: #{tpu_custom_call.1} parent=1 // pred_region
      %31 = dma.done [#allocation3], 256
    $region13: #{tpu_custom_call.1} parent=1 // pred_fallthru
      _
    // Predicated region
    $region14: #{tpu_custom_call.1} parent=1 // pred_check
      _
    $region15: #{tpu_custom_call.1} parent=1 // pred_check_branch
      %33 = sbr.rel (0) target = $region17
    $region16: #{tpu_custom_call.1} parent=1 // pred_region
      %34 = dma.done [#allocation5], 256
    $region17: #{tpu_custom_call.1} parent=1 // pred_fallthru
      _
    %p35 = scmp.eq.s32.totalorder 0, 0
    // Predicated region
    $region18: #{tpu_custom_call.1} parent=1 // pred_check
      %p36 = pneg %p35
    $region19: #{tpu_custom_call.1} parent=1 // pred_check_branch
      %38 = sbr.rel (%p36) target = $region21
    $region20: #{tpu_custom_call.1} parent=1 // pred_region
      %vm39 = vcmask 7168
      %40 = vst.msk [vmem:[%s2] sm:$0xff] %vm39, 0.0
    $region21: #{tpu_custom_call.1} parent=1 // pred_fallthru
      _
    %v41 = vld [vmem:[#allocation2] sm:$0xff]
    %v42 = vld [vmem:[#allocation2 + $0x8] sm:$0xff]
    %v43 = vadd.f32 %v41, %v42
    %44 = vadd.xlane.f32.xlu0 %v43
    %v45 = vpop.xlane.xlu0 %44
    %v46 = vld [vmem:[#allocation4] sm:$0xff]
    %v47 = vld [vmem:[#allocation4 + $0x8] sm:$0xff]
    %v48 = vadd.f32 %v46, %v47
    %49 = vadd.xlane.f32.xlu0 %v48
    %v50 = vpop.xlane.xlu0 %49
    %v51 = vadd.f32 %v45, %v50
    %v52 = vld [vmem:[%s2] sm:$0xff]
    %v53 = vadd.f32 %v52, %v51
    %vm54 = vcmask 7168
    %55 = vst.msk [vmem:[%s2] sm:$0xff] %vm54, %v53
    // Predicated region
    $region22: #{tpu_custom_call.1} parent=1 // pred_check
      _
    $region23: #{tpu_custom_call.1} parent=1 // pred_check_branch
      %57 = sbr.rel (0) target = $region25
    $region24: #{tpu_custom_call.1} parent=1 // pred_region
      _
    $region25: #{tpu_custom_call.1} parent=1 // pred_fallthru
      _
    // Predicated region
    $region26: #{tpu_custom_call.1} parent=1 // pred_check
      _
    $region27: #{tpu_custom_call.1} parent=1 // pred_check_branch
      %59 = sbr.rel (0) target = $region29
    $region28: #{tpu_custom_call.1} parent=1 // pred_region
      _
    $region29: #{tpu_custom_call.1} parent=1 // pred_fallthru
      _
    %60 = vsyncpa [#allocation3], 1
    %61 = vsyncpa [#allocation5], 1

</llo_original>
